<compile_context>
chip_gen: v7x
topology: tpu7x:2x2x1
jax: 0.10.0
libtpu: 0.0.40
codegen_flags: <defaults>
</compile_context>

<pallas_src>
import math

import jax
import jax.numpy as jnp
from jax.experimental import pallas as pl
from jax.experimental.pallas import tpu as pltpu


def _extrapolated_euler_kernel(dt_ref, state_ref, w_ref, b_ref, n1_ref, n2_ref,
                               state_out_ref, drift_out_ref, dw_out_ref):
    """One extrapolated-EM step on one batch tile.

    dt_ref:     (2,)        f32 SMEM  -- [dt/2, sqrt(dt/2)]
    state_ref:  (2, TB, D)  f32       -- [0]=fine chunk, [1]=coarse chunk
    w_ref:      (D, D)      bf16      -- VMEM-resident linear drift weight
    b_ref:      (1, D)      f32       -- drift bias
    n1/n2_ref:  (TB, D)     f32       -- standard-normal draws (common randoms)
    """
    half_dt = dt_ref[0]
    sqrt_half_dt = dt_ref[1]
    dt = half_dt * 2.0

    tb = state_ref.shape[1]
    d = state_ref.shape[2]

    w = w_ref[...]                            # bf16 weight, reused by both drifts
    bias = b_ref[...].astype(jnp.float32)     # hoisted: broadcast emitted once

    def drift_fn(x_f32):
        # linear drift x @ W + b: bf16 MXU inputs, f32 accumulation
        return jnp.dot(x_f32.astype(jnp.bfloat16), w,
                       preferred_element_type=jnp.float32) + bias

    state = state_ref[...]                    # (2, TB, D) f32
    state_1 = state[0]                        # fine chunk
    state_1_ = state[1]                       # coarse chunk

    # One MXU call with M = 2*TB covers the drift of both chunks.
    drift_all = drift_fn(state.reshape(2 * tb, d))
    drift_1 = drift_all[:tb]
    drift_1_ = drift_all[tb:]

    # fine path: two EM steps of dt/2 with common random numbers
    dW_1 = n1_ref[...] * sqrt_half_dt
    state_2 = state_1 + dW_1 + drift_1 * half_dt
    dW_2 = n2_ref[...] * sqrt_half_dt
    drift_2 = drift_fn(state_2)
    state_3 = state_2 + dW_2 + drift_2 * half_dt

    # coarse path: one EM step of dt reusing the summed increment
    dW_1_ = dW_1 + dW_2
    state_3_ = state_1_ + dW_1_ + drift_1_ * dt

    state_out_ref[0] = state_3.astype(state_out_ref.dtype)
    state_out_ref[1] = state_3_.astype(state_out_ref.dtype)
    drift_out_ref[...] = drift_all.reshape(2, tb, d).astype(drift_out_ref.dtype)
    # TODO(synk): the reference module returns an undefined name `dW` (a
    # NameError in PyTorch); we return the combined fine increment dW_1 + dW_2.
    dw_out_ref[...] = dW_1_.astype(dw_out_ref.dtype)


def _pick_batch_tile(half_b, max_tile=512):
    """Largest sublane-friendly batch tile (<= max_tile) dividing the half-batch."""
    if half_b <= max_tile:
        return half_b
    for t in range(max_tile, 7, -1):
        if t % 8 == 0 and half_b % t == 0:
            return t
    return half_b


def extrapolated_euler(state, w, b, noise1, noise2, dt, *, tb=None):
    """One ExtrapolatedEuler step.  Returns (state, drift, dW) like the module."""
    two_b, d = state.shape
    assert two_b % 2 == 0, "batch must hold a fine and a coarse chunk"
    half_b = two_b // 2
    if tb is None:
        tb = _pick_batch_tile(half_b)
    assert half_b % tb == 0, "batch tile must divide the half-batch"
    grid = (half_b // tb,)

    # fine / coarse chunks as a leading axis so one batch-grid tile covers both
    state3 = state.reshape(2, half_b, d).astype(jnp.float32)
    w_bf16 = w.astype(jnp.bfloat16)               # halves W's HBM/VMEM traffic
    b2 = b.reshape(1, d).astype(jnp.float32)

    dt_arr = jnp.asarray(dt, dtype=jnp.float32)   # dt is data, not a compile const
    dt_params = jnp.stack([dt_arr * 0.5, jnp.sqrt(dt_arr * 0.5)])

    state_out, drift_out, dw_out = pl.pallas_call(
        _extrapolated_euler_kernel,
        grid=grid,
        out_shape=(
            jax.ShapeDtypeStruct((2, half_b, d), jnp.float32),   # state
            jax.ShapeDtypeStruct((2, half_b, d), jnp.float32),   # drift
            jax.ShapeDtypeStruct((half_b, d), jnp.float32),      # dW_1 + dW_2
        ),
        in_specs=[
            pl.BlockSpec(memory_space=pltpu.MemorySpace.SMEM),   # dt scalars
            pl.BlockSpec((2, tb, d), lambda i: (0, i, 0)),       # state (tiled)
            pl.BlockSpec((d, d), lambda i: (0, 0)),              # W (VMEM resident)
            pl.BlockSpec((1, d), lambda i: (0, 0)),              # bias
            pl.BlockSpec((tb, d), lambda i: (i, 0)),             # normal draw #1
            pl.BlockSpec((tb, d), lambda i: (i, 0)),             # normal draw #2
        ],
        out_specs=(
            pl.BlockSpec((2, tb, d), lambda i: (0, i, 0)),
            pl.BlockSpec((2, tb, d), lambda i: (0, i, 0)),
            pl.BlockSpec((tb, d), lambda i: (i, 0)),
        ),
        input_output_aliases={1: 0},      # state buffer updated in place
        compiler_params=pltpu.CompilerParams(
            dimension_semantics=("parallel",)),
    )(dt_params, state3, w_bf16, b2, noise1, noise2)

    # TODO(synk): a multi-step integration loop (in-kernel RNG + fori_loop over
    # steps with state VMEM-resident) would remove the per-step HBM round-trip;
    # kept single-step to match the module's forward() semantics.
    return (state_out.reshape(two_b, d), drift_out.reshape(two_b, d), dw_out)


def _reference(state, w, b, noise1, noise2, dt):
    """Pure-JAX reference mirroring the PyTorch forward (for a sanity check)."""
    B = state.shape[0] // 2
    drift_fn = lambda x: jnp.dot(x, w, precision=jax.lax.Precision.HIGHEST) + b
    state_1, state_1_ = state[:B], state[B:]
    drift_all = drift_fn(state)
    drift_1, drift_1_ = drift_all[:B], drift_all[B:]
    dW_1 = noise1 * math.sqrt(dt / 2)
    state_2 = state_1 + dW_1 + drift_1 * (dt / 2)
    dW_2 = noise2 * math.sqrt(dt / 2)
    drift_2 = drift_fn(state_2)
    state_3 = state_2 + dW_2 + drift_2 * (dt / 2)
    dW_1_ = dW_1 + dW_2
    state_3_ = state_1_ + dW_1_ + drift_1_ * dt
    return (jnp.concatenate([state_3, state_3_]), drift_all, dW_1_)


if __name__ == "__main__":
    key = jax.random.PRNGKey(0)
    k_state, k_w, k_b, k_n1, k_n2 = jax.random.split(key, 5)

    two_b, d = 32, 128           # two chunks of 16 rows, 128 features
    half_b = two_b // 2
    dt = 0.01

    state = jax.random.normal(k_state, (two_b, d), dtype=jnp.float32)
    w = 0.05 * jax.random.normal(k_w, (d, d), dtype=jnp.float32)
    b = 0.01 * jax.random.normal(k_b, (1, d), dtype=jnp.float32)
    noise1 = jax.random.normal(k_n1, (half_b, d), dtype=jnp.float32)
    noise2 = jax.random.normal(k_n2, (half_b, d), dtype=jnp.float32)

    # tb=8 -> grid of 2 batch tiles, exercising the pipelined/tiled path.
    state_out, drift_out, dw_out = extrapolated_euler(
        state, w, b, noise1, noise2, dt, tb=8)
    jax.block_until_ready((state_out, drift_out, dw_out))

    # sanity check against the pure-JAX reference
    ref_state, ref_drift, ref_dw = _reference(state, w, b, noise1, noise2, dt)
    assert jnp.allclose(state_out, ref_state, rtol=5e-2, atol=5e-2)
    assert jnp.allclose(drift_out, ref_drift, rtol=5e-2, atol=5e-2)
    assert jnp.allclose(dw_out, ref_dw, rtol=5e-2, atol=5e-2)

    print("KERNEL_OK")
</pallas_src>

<mosaic_0001>
module attributes {stable_mosaic.version = 11 : i64} {
  func.func @_extrapolated_euler_kernel(%arg0: i32, %arg1: memref<2xf32, #tpu.memory_space<smem>>, %arg2: memref<2x8x128xf32, #tpu.memory_space<vmem>>, %arg3: memref<128x128xbf16, #tpu.memory_space<vmem>>, %arg4: memref<1x128xf32, #tpu.memory_space<vmem>>, %arg5: memref<8x128xf32, #tpu.memory_space<vmem>>, %arg6: memref<8x128xf32, #tpu.memory_space<vmem>>, %arg7: memref<2x8x128xf32, #tpu.memory_space<vmem>>, %arg8: memref<2x8x128xf32, #tpu.memory_space<vmem>>, %arg9: memref<8x128xf32, #tpu.memory_space<vmem>>) attributes {dimension_semantics = [#tpu.dimension_semantics<parallel>], iteration_bounds = array<i64: 2>, scalar_prefetch = 0 : i64, scratch_operands = 0 : i64, tpu.core_type = #tpu.core_type<tc>, window_params = [{transform_indices = @transform_0, window_bounds = array<i64: 2>}, {transform_indices = @transform_1, window_bounds = array<i64: 2, 8, 128>}, {pipeline_mode = #tpu.pipeline_mode<synchronous>, transform_indices = @transform_2, window_bounds = array<i64: 128, 128>}, {pipeline_mode = #tpu.pipeline_mode<synchronous>, transform_indices = @transform_3, window_bounds = array<i64: 1, 128>}, {transform_indices = @transform_4, window_bounds = array<i64: 8, 128>}, {transform_indices = @transform_5, window_bounds = array<i64: 8, 128>}, {transform_indices = @transform_6, window_bounds = array<i64: 2, 8, 128>}, {transform_indices = @transform_7, window_bounds = array<i64: 2, 8, 128>}, {transform_indices = @transform_8, window_bounds = array<i64: 8, 128>}]} {
    %c0 = arith.constant 0 : index
    %0 = memref.load %arg1[%c0] : memref<2xf32, #tpu.memory_space<smem>>
    %c1 = arith.constant 1 : index
    %1 = memref.load %arg1[%c1] : memref<2xf32, #tpu.memory_space<smem>>
    %cst = arith.constant 2.000000e+00 : f32
    %2 = arith.mulf %0, %cst : f32
    %c0_0 = arith.constant 0 : index
    %c0_1 = arith.constant 0 : index
    %3 = vector.load %arg3[%c0_0, %c0_1] : memref<128x128xbf16, #tpu.memory_space<vmem>>, vector<128x128xbf16>
    %c0_2 = arith.constant 0 : index
    %c0_3 = arith.constant 0 : index
    %4 = vector.load %arg4[%c0_2, %c0_3] : memref<1x128xf32, #tpu.memory_space<vmem>>, vector<1x128xf32>
    %c0_4 = arith.constant 0 : index
    %c0_5 = arith.constant 0 : index
    %c0_6 = arith.constant 0 : index
    %5 = vector.load %arg2[%c0_4, %c0_5, %c0_6] : memref<2x8x128xf32, #tpu.memory_space<vmem>>, vector<2x8x128xf32>
    %6 = vector.extract_strided_slice %5 {offsets = [0, 0, 0], sizes = [1, 8, 128], strides = [1, 1, 1]} : vector<2x8x128xf32> to vector<1x8x128xf32>
    %7 = vector.shape_cast %6 : vector<1x8x128xf32> to vector<8x128xf32>
    %8 = vector.extract_strided_slice %5 {offsets = [1, 0, 0], sizes = [1, 8, 128], strides = [1, 1, 1]} : vector<2x8x128xf32> to vector<1x8x128xf32>
    %9 = vector.shape_cast %8 : vector<1x8x128xf32> to vector<8x128xf32>
    %10 = vector.shape_cast %5 : vector<2x8x128xf32> to vector<16x128xf32>
    %11 = arith.truncf %10 : vector<16x128xf32> to vector<16x128xbf16>
    %cst_7 = arith.constant dense<0.000000e+00> : vector<16x128xf32>
    %12 = tpu.matmul %11, %3, %cst_7 {dimension_numbers = #tpu.dot_dimension_numbers<[1], [0], [0], [1], [0, 0, 1, 1], [], []>} : vector<16x128xbf16>, vector<128x128xbf16>, vector<16x128xf32> -> vector<16x128xf32>
    %13 = vector.broadcast %4 : vector<1x128xf32> to vector<16x128xf32>
    %14 = arith.addf %12, %13 : vector<16x128xf32>
    %15 = vector.extract_strided_slice %14 {offsets = [0, 0], sizes = [8, 128], strides = [1, 1]} : vector<16x128xf32> to vector<8x128xf32>
    %16 = vector.extract_strided_slice %14 {offsets = [8, 0], sizes = [8, 128], strides = [1, 1]} : vector<16x128xf32> to vector<8x128xf32>
    %c0_8 = arith.constant 0 : index
    %c0_9 = arith.constant 0 : index
    %17 = vector.load %arg5[%c0_8, %c0_9] : memref<8x128xf32, #tpu.memory_space<vmem>>, vector<8x128xf32>
    %18 = vector.broadcast %1 : f32 to vector<8x128xf32>
    %19 = arith.mulf %17, %18 : vector<8x128xf32>
    %20 = arith.addf %7, %19 : vector<8x128xf32>
    %21 = vector.broadcast %0 : f32 to vector<8x128xf32>
    %22 = arith.mulf %15, %21 : vector<8x128xf32>
    %23 = arith.addf %20, %22 : vector<8x128xf32>
    %c0_10 = arith.constant 0 : index
    %c0_11 = arith.constant 0 : index
    %24 = vector.load %arg6[%c0_10, %c0_11] : memref<8x128xf32, #tpu.memory_space<vmem>>, vector<8x128xf32>
    %25 = vector.broadcast %1 : f32 to vector<8x128xf32>
    %26 = arith.mulf %24, %25 : vector<8x128xf32>
    %27 = arith.truncf %23 : vector<8x128xf32> to vector<8x128xbf16>
    %cst_12 = arith.constant dense<0.000000e+00> : vector<8x128xf32>
    %28 = tpu.matmul %27, %3, %cst_12 {dimension_numbers = #tpu.dot_dimension_numbers<[1], [0], [0], [1], [0, 0, 1, 1], [], []>} : vector<8x128xbf16>, vector<128x128xbf16>, vector<8x128xf32> -> vector<8x128xf32>
    %29 = vector.broadcast %4 : vector<1x128xf32> to vector<8x128xf32>
    %30 = arith.addf %28, %29 : vector<8x128xf32>
    %31 = arith.addf %23, %26 : vector<8x128xf32>
    %32 = vector.broadcast %0 : f32 to vector<8x128xf32>
    %33 = arith.mulf %30, %32 : vector<8x128xf32>
    %34 = arith.addf %31, %33 : vector<8x128xf32>
    %35 = arith.addf %19, %26 : vector<8x128xf32>
    %36 = arith.addf %9, %35 : vector<8x128xf32>
    %37 = vector.broadcast %2 : f32 to vector<8x128xf32>
    %38 = arith.mulf %16, %37 : vector<8x128xf32>
    %39 = arith.addf %36, %38 : vector<8x128xf32>
    %c0_13 = arith.constant 0 : index
    %c0_14 = arith.constant 0 : index
    %c0_15 = arith.constant 0 : index
    %40 = vector.load %arg7[%c0_13, %c0_14, %c0_15] : memref<2x8x128xf32, #tpu.memory_space<vmem>>, vector<1x8x128xf32>
    %41 = vector.shape_cast %40 : vector<1x8x128xf32> to vector<8x128xf32>
    %42 = vector.shape_cast %34 : vector<8x128xf32> to vector<1x8x128xf32>
    tpu.vector_store %arg7[%c0_13, %c0_14, %c0_15], %42 {strides = array<i32>} : memref<2x8x128xf32, #tpu.memory_space<vmem>>, vector<1x8x128xf32>,
    %c1_16 = arith.constant 1 : index
    %c0_17 = arith.constant 0 : index
    %c0_18 = arith.constant 0 : index
    %43 = vector.load %arg7[%c1_16, %c0_17, %c0_18] : memref<2x8x128xf32, #tpu.memory_space<vmem>>, vector<1x8x128xf32>
    %44 = vector.shape_cast %43 : vector<1x8x128xf32> to vector<8x128xf32>
    %45 = vector.shape_cast %39 : vector<8x128xf32> to vector<1x8x128xf32>
    tpu.vector_store %arg7[%c1_16, %c0_17, %c0_18], %45 {strides = array<i32>} : memref<2x8x128xf32, #tpu.memory_space<vmem>>, vector<1x8x128xf32>,
    %46 = vector.shape_cast %14 : vector<16x128xf32> to vector<2x8x128xf32>
    %c0_19 = arith.constant 0 : index
    %c0_20 = arith.constant 0 : index
    %c0_21 = arith.constant 0 : index
    %47 = vector.load %arg8[%c0_19, %c0_20, %c0_21] : memref<2x8x128xf32, #tpu.memory_space<vmem>>, vector<2x8x128xf32>
    tpu.vector_store %arg8[%c0_19, %c0_20, %c0_21], %46 {strides = array<i32>} : memref<2x8x128xf32, #tpu.memory_space<vmem>>, vector<2x8x128xf32>,
    %c0_22 = arith.constant 0 : index
    %c0_23 = arith.constant 0 : index
    %48 = vector.load %arg9[%c0_22, %c0_23] : memref<8x128xf32, #tpu.memory_space<vmem>>, vector<8x128xf32>
    tpu.vector_store %arg9[%c0_22, %c0_23], %35 {strides = array<i32>} : memref<8x128xf32, #tpu.memory_space<vmem>>, vector<8x128xf32>,
    return
  }
  func.func @transform_0(%arg0: i32) -> i32 {
    %c0_i32 = arith.constant 0 : i32
    %c0_i32_0 = arith.constant 0 : i32
    return %c0_i32 : i32
  }
  func.func @transform_1(%arg0: i32) -> (i32, i32, i32) {
    %c0_i32 = arith.constant 0 : i32
    %c0_i32_0 = arith.constant 0 : i32
    %c0_i32_1 = arith.constant 0 : i32
    return %c0_i32, %arg0, %c0_i32_0 : i32, i32, i32
  }
  func.func @transform_2(%arg0: i32) -> (i32, i32) {
    %c0_i32 = arith.constant 0 : i32
    %c0_i32_0 = arith.constant 0 : i32
    %c0_i32_1 = arith.constant 0 : i32
    return %c0_i32, %c0_i32_0 : i32, i32
  }
  func.func @transform_3(%arg0: i32) -> (i32, i32) {
    %c0_i32 = arith.constant 0 : i32
    %c0_i32_0 = arith.constant 0 : i32
    %c0_i32_1 = arith.constant 0 : i32
    return %c0_i32, %c0_i32_0 : i32, i32
  }
  func.func @transform_4(%arg0: i32) -> (i32, i32) {
    %c0_i32 = arith.constant 0 : i32
    %c0_i32_0 = arith.constant 0 : i32
    return %arg0, %c0_i32 : i32, i32
  }
  func.func @transform_5(%arg0: i32) -> (i32, i32) {
    %c0_i32 = arith.constant 0 : i32
    %c0_i32_0 = arith.constant 0 : i32
    return %arg0, %c0_i32 : i32, i32
  }
  func.func @transform_6(%arg0: i32) -> (i32, i32, i32) {
    %c0_i32 = arith.constant 0 : i32
    %c0_i32_0 = arith.constant 0 : i32
    %c0_i32_1 = arith.constant 0 : i32
    return %c0_i32, %arg0, %c0_i32_0 : i32, i32, i32
  }
  func.func @transform_7(%arg0: i32) -> (i32, i32, i32) {
    %c0_i32 = arith.constant 0 : i32
    %c0_i32_0 = arith.constant 0 : i32
    %c0_i32_1 = arith.constant 0 : i32
    return %c0_i32, %arg0, %c0_i32_0 : i32, i32, i32
  }
  func.func @transform_8(%arg0: i32) -> (i32, i32) {
    %c0_i32 = arith.constant 0 : i32
    %c0_i32_0 = arith.constant 0 : i32
    return %arg0, %c0_i32 : i32, i32
  }
}

</mosaic_0001>

<llo_original>
// kernel: tpu_custom_call.1
$region0: #{tpu_custom_call.1}
  #allocation0 [shape = 'u32[]', space=smem, size = 0x4, offset = 0x4, fixed_abs, tag = 'smem constant byte address 0x4 - core index']
  #allocation1 [shape = 'u32[144,128]{1,0:T(1,128)}', space=vmem, size = 0x12000, scoped, tag = 'internal scratch']
  %s0 = inlined_call_operand.vmem [shape: f32[2], index: 0, kind: input, shape index: {}]
  %s1 = inlined_call_operand.hbm [shape: f32[2,16,128], index: 1, kind: input, shape index: {}, may-alias: {1,6}]
  %s2 = inlined_call_operand.vmem [shape: bf16[128,128], index: 2, kind: input, shape index: {}]
  %s3 = inlined_call_operand.vmem [shape: f32[1,128], index: 3, kind: input, shape index: {}]
  %s4 = inlined_call_operand.hbm [shape: f32[16,128], index: 4, kind: input, shape index: {}]
  %s5 = inlined_call_operand.hbm [shape: f32[16,128], index: 5, kind: input, shape index: {}]
  %s6 = inlined_call_operand.hbm [shape: f32[2,16,128], index: 6, kind: output, shape index: {0}, may-alias: {1,6}]
  %s7 = inlined_call_operand.hbm [shape: f32[2,16,128], index: 7, kind: output, shape index: {1}]
  %s8 = inlined_call_operand.hbm [shape: f32[16,128], index: 8, kind: output, shape index: {2}]
  %9 = xla_tuple %s6, %s7, %s8
  %s10 = sld [smem:[#allocation0]]
  $region89: #{tpu_custom_call.1} parent=0
    _
  %s12 = ssub.s32 1, %s10
  %s13 = scalar_select 0, %s12, %s10
  $region1: #{tpu_custom_call.1} parent=0
    #allocation2 [shape = 'u8[512]{0}', space=smem, size = 0x200, scoped, tag = 'input window, operand 0, single buffered']
    #allocation3 [shape = 's32[2]{0}', space=sflag, size = 0x8, scoped, tag = 'scoped memory for tpu_custom_call.1']
    #allocation4 [shape = 's32[2]{0}', space=sflag, size = 0x8, scoped, tag = 'scoped memory for tpu_custom_call.1']
    #allocation5 [shape = 's32[2]{0}', space=sflag, size = 0x8, scoped, tag = 'scoped memory for tpu_custom_call.1']
    #allocation6 [shape = 'u8[16384]{0}', space=vmem, size = 0x4000, scoped, tag = 'input window, operand 1']
    #allocation7 [shape = 'u8[8192]{0}', space=vmem, size = 0x2000, scoped, tag = 'input window, operand 4']
    #allocation8 [shape = 's32[2]{0}', space=sflag, size = 0x8, scoped, tag = 'scoped memory for tpu_custom_call.1']
    #allocation9 [shape = 'u8[8192]{0}', space=vmem, size = 0x2000, scoped, tag = 'input window, operand 5']
    #allocation10 [shape = 'u8[16384]{0}', space=vmem, size = 0x4000, scoped, tag = 'output window, operand 0']
    #allocation11 [shape = 'u8[16384]{0}', space=vmem, size = 0x4000, scoped, tag = 'output window, operand 1']
    #allocation12 [shape = 's32[2]{0}', space=sflag, size = 0x8, scoped, tag = 'scoped memory for tpu_custom_call.1']
    #allocation13 [shape = 'u8[8192]{0}', space=vmem, size = 0x2000, scoped, tag = 'output window, operand 2']
    %14 = vsyncpa [#allocation5], 0
    %15 = vsyncpa [#allocation3], 0
    %s16 = scalar_lea.sflag [#allocation3], 1
    %17 = vsyncpa %s16, 0
    %18 = vsyncpa [#allocation8], 0
    %s19 = scalar_lea.sflag [#allocation8], 1
    %20 = vsyncpa %s19, 0
    %21 = vsyncpa [#allocation4], 0
    %s22 = scalar_lea.sflag [#allocation4], 1
    %23 = vsyncpa %s22, 0
    %24 = vsyncpa [#allocation12], 0
    %s25 = scalar_lea.sflag [#allocation12], 1
    %26 = vsyncpa %s25, 0
    loop: start=0, step=1, limit=4
    $region2: #{tpu_custom_call.1} parent=1 // loop_pre_header
      _
    $region3: #{tpu_custom_call.1} parent=1 // loop_header
      %s28 = sphi 0, %s32
      %p29 = scmp.ge.s32.totalorder %s28, 4
      %s36 = sphi 0, %s36
      %s38 = sphi 0, %s36
      %s39 = sphi 0, %s38
      %s53 = sphi 0, %s39
      %s59 = sphi 0, %s61
      %s62 = sphi 0, %s59
      %s63 = sphi 0, %s62
      %s79 = sphi 0, %s63
      %s83 = sphi 0, %s83
      %s85 = sphi 0, %s83
      %s86 = sphi 0, %s85
      %s100 = sphi 0, %s86
      %s104 = sphi 0, %s104
      %s106 = sphi 0, %s104
      %s107 = sphi 0, %s106
      %s121 = sphi 0, %s107
      %s127 = sphi 0, %s129
      %s130 = sphi 0, %s127
      %s131 = sphi 0, %s130
      %s147 = sphi 0, %s131
      %s153 = sphi 0, %s155
      %s156 = sphi 0, %s153
      %s157 = sphi 0, %s156
      %s173 = sphi 0, %s157
      %s179 = sphi 0, %s181
      %s182 = sphi 0, %s179
      %s183 = sphi 0, %s182
      %s199 = sphi 0, %s183
      %s205 = sphi 0, %s207
      %s208 = sphi 0, %s205
      %s209 = sphi 0, %s208
      %s225 = sphi 0, %s209
      %s231 = sphi 0, %s233
      %s234 = sphi 0, %s231
      %s235 = sphi 0, %s234
      %s251 = sphi 0, %s235
    $region4: #{tpu_custom_call.1} parent=1 // loop_header_branch
      %31 = sbr.rel (%p29) target = $region8
    $region5: #{tpu_custom_call.1} parent=1 // loop_body
      %s33 = ssub.s32 %s28, 1
      %s34 = ssub.s32 %s28, 2
      %s35 = sadd.s32 %s28, 1
      %s37 = sadd.s32 %s36, 1
      %p40 = scmp.eq.s32.totalorder %s28, 1
      %p41 = scmp.ne.s32.totalorder %s36, %s38
      %p42 = scmp.eq.s32.totalorder %s28, 0
      %p43 = por %p41, %p42
      %p44 = scmp.ne.s32.totalorder %s36, %s38
      %p45 = scmp.eq.s32.totalorder %s33, 1
      %p46 = por %p44, %p45
      %p47 = scmp.ne.s32.totalorder %s38, %s39
      %p48 = scmp.eq.s32.totalorder %s33, 0
      %p49 = por %p47, %p48
      %p50 = scmp.ne.s32.totalorder %s38, %s39
      %p51 = scmp.eq.s32.totalorder %s34, 1
      %p52 = por %p50, %p51
      %p54 = scmp.ne.s32.totalorder %s39, %s53
      %p55 = scmp.eq.s32.totalorder %s34, 0
      %p56 = por %p54, %p55
      %s57 = ssub.s32 %s28, %s35
      %p58 = scmp.eq.s32.totalorder %s57, 0
      %s60 = sadd.s32 %s59, 1
      %s61 = scalar_select %p58, %s59, %s60
      %p64 = pneg %p58
      %p65 = scmp.eq.s32.totalorder %s28, 1
      %p66 = por %p64, %p65
      %p67 = scmp.ne.s32.totalorder %s59, %s62
      %p68 = scmp.eq.s32.totalorder %s28, 0
      %p69 = por %p67, %p68
      %p70 = scmp.ne.s32.totalorder %s59, %s62
      %p71 = scmp.eq.s32.totalorder %s33, 1
      %p72 = por %p70, %p71
      %p73 = scmp.ne.s32.totalorder %s62, %s63
      %p74 = scmp.eq.s32.totalorder %s33, 0
      %p75 = por %p73, %p74
      %p76 = scmp.ne.s32.totalorder %s62, %s63
      %p77 = scmp.eq.s32.totalorder %s34, 1
      %p78 = por %p76, %p77
      %p80 = scmp.ne.s32.totalorder %s63, %s79
      %p81 = scmp.eq.s32.totalorder %s34, 0
      %p82 = por %p80, %p81
      %s84 = sadd.s32 %s83, 1
      %p87 = scmp.eq.s32.totalorder %s28, 1
      %p88 = scmp.ne.s32.totalorder %s83, %s85
      %p89 = scmp.eq.s32.totalorder %s28, 0
      %p90 = por %p88, %p89
      %p91 = scmp.ne.s32.totalorder %s83, %s85
      %p92 = scmp.eq.s32.totalorder %s33, 1
      %p93 = por %p91, %p92
      %p94 = scmp.ne.s32.totalorder %s85, %s86
      %p95 = scmp.eq.s32.totalorder %s33, 0
      %p96 = por %p94, %p95
      %p97 = scmp.ne.s32.totalorder %s85, %s86
      %p98 = scmp.eq.s32.totalorder %s34, 1
      %p99 = por %p97, %p98
      %p101 = scmp.ne.s32.totalorder %s86, %s100
      %p102 = scmp.eq.s32.totalorder %s34, 0
      %p103 = por %p101, %p102
      %s105 = sadd.s32 %s104, 1
      %p108 = scmp.eq.s32.totalorder %s28, 1
      %p109 = scmp.ne.s32.totalorder %s104, %s106
      %p110 = scmp.eq.s32.totalorder %s28, 0
      %p111 = por %p109, %p110
      %p112 = scmp.ne.s32.totalorder %s104, %s106
      %p113 = scmp.eq.s32.totalorder %s33, 1
      %p114 = por %p112, %p113
      %p115 = scmp.ne.s32.totalorder %s106, %s107
      %p116 = scmp.eq.s32.totalorder %s33, 0
      %p117 = por %p115, %p116
      %p118 = scmp.ne.s32.totalorder %s106, %s107
      %p119 = scmp.eq.s32.totalorder %s34, 1
      %p120 = por %p118, %p119
      %p122 = scmp.ne.s32.totalorder %s107, %s121
      %p123 = scmp.eq.s32.totalorder %s34, 0
      %p124 = por %p122, %p123
      %s125 = ssub.s32 %s28, %s35
      %p126 = scmp.eq.s32.totalorder %s125, 0
      %s128 = sadd.s32 %s127, 1
      %s129 = scalar_select %p126, %s127, %s128
      %p132 = pneg %p126
      %p133 = scmp.eq.s32.totalorder %s28, 1
      %p134 = por %p132, %p133
      %p135 = scmp.ne.s32.totalorder %s127, %s130
      %p136 = scmp.eq.s32.totalorder %s28, 0
      %p137 = por %p135, %p136
      %p138 = scmp.ne.s32.totalorder %s127, %s130
      %p139 = scmp.eq.s32.totalorder %s33, 1
      %p140 = por %p138, %p139
      %p141 = scmp.ne.s32.totalorder %s130, %s131
      %p142 = scmp.eq.s32.totalorder %s33, 0
      %p143 = por %p141, %p142
      %p144 = scmp.ne.s32.totalorder %s130, %s131
      %p145 = scmp.eq.s32.totalorder %s34, 1
      %p146 = por %p144, %p145
      %p148 = scmp.ne.s32.totalorder %s131, %s147
      %p149 = scmp.eq.s32.totalorder %s34, 0
      %p150 = por %p148, %p149
      %s151 = ssub.s32 %s28, %s35
      %p152 = scmp.eq.s32.totalorder %s151, 0
      %s154 = sadd.s32 %s153, 1
      %s155 = scalar_select %p152, %s153, %s154
      %p158 = pneg %p152
      %p159 = scmp.eq.s32.totalorder %s28, 1
      %p160 = por %p158, %p159
      %p161 = scmp.ne.s32.totalorder %s153, %s156
      %p162 = scmp.eq.s32.totalorder %s28, 0
      %p163 = por %p161, %p162
      %p164 = scmp.ne.s32.totalorder %s153, %s156
      %p165 = scmp.eq.s32.totalorder %s33, 1
      %p166 = por %p164, %p165
      %p167 = scmp.ne.s32.totalorder %s156, %s157
      %p168 = scmp.eq.s32.totalorder %s33, 0
      %p169 = por %p167, %p168
      %p170 = scmp.ne.s32.totalorder %s156, %s157
      %p171 = scmp.eq.s32.totalorder %s34, 1
      %p172 = por %p170, %p171
      %p174 = scmp.ne.s32.totalorder %s157, %s173
      %p175 = scmp.eq.s32.totalorder %s34, 0
      %p176 = por %p174, %p175
      %s177 = ssub.s32 %s28, %s35
      %p178 = scmp.eq.s32.totalorder %s177, 0
      %s180 = sadd.s32 %s179, 1
      %s181 = scalar_select %p178, %s179, %s180
      %p184 = pneg %p178
      %p185 = scmp.eq.s32.totalorder %s28, 1
      %p186 = por %p184, %p185
      %p187 = scmp.ne.s32.totalorder %s179, %s182
      %p188 = scmp.eq.s32.totalorder %s28, 0
      %p189 = por %p187, %p188
      %p190 = scmp.ne.s32.totalorder %s179, %s182
      %p191 = scmp.eq.s32.totalorder %s33, 1
      %p192 = por %p190, %p191
      %p193 = scmp.ne.s32.totalorder %s182, %s183
      %p194 = scmp.eq.s32.totalorder %s33, 0
      %p195 = por %p193, %p194
      %p196 = scmp.ne.s32.totalorder %s182, %s183
      %p197 = scmp.eq.s32.totalorder %s34, 1
      %p198 = por %p196, %p197
      %p200 = scmp.ne.s32.totalorder %s183, %s199
      %p201 = scmp.eq.s32.totalorder %s34, 0
      %p202 = por %p200, %p201
      %s203 = ssub.s32 %s28, %s35
      %p204 = scmp.eq.s32.totalorder %s203, 0
      %s206 = sadd.s32 %s205, 1
      %s207 = scalar_select %p204, %s205, %s206
      %p210 = pneg %p204
      %p211 = scmp.eq.s32.totalorder %s28, 1
      %p212 = por %p210, %p211
      %p213 = scmp.ne.s32.totalorder %s205, %s208
      %p214 = scmp.eq.s32.totalorder %s28, 0
      %p215 = por %p213, %p214
      %p216 = scmp.ne.s32.totalorder %s205, %s208
      %p217 = scmp.eq.s32.totalorder %s33, 1
      %p218 = por %p216, %p217
      %p219 = scmp.ne.s32.totalorder %s208, %s209
      %p220 = scmp.eq.s32.totalorder %s33, 0
      %p221 = por %p219, %p220
      %p222 = scmp.ne.s32.totalorder %s208, %s209
      %p223 = scmp.eq.s32.totalorder %s34, 1
      %p224 = por %p222, %p223
      %p226 = scmp.ne.s32.totalorder %s209, %s225
      %p227 = scmp.eq.s32.totalorder %s34, 0
      %p228 = por %p226, %p227
      %s229 = ssub.s32 %s28, %s35
      %p230 = scmp.eq.s32.totalorder %s229, 0
      %s232 = sadd.s32 %s231, 1
      %s233 = scalar_select %p230, %s231, %s232
      %p236 = pneg %p230
      %p237 = scmp.eq.s32.totalorder %s28, 1
      %p238 = por %p236, %p237
      %p239 = scmp.ne.s32.totalorder %s231, %s234
      %p240 = scmp.eq.s32.totalorder %s28, 0
      %p241 = por %p239, %p240
      %p242 = scmp.ne.s32.totalorder %s231, %s234
      %p243 = scmp.eq.s32.totalorder %s33, 1
      %p244 = por %p242, %p243
      %p245 = scmp.ne.s32.totalorder %s234, %s235
      %p246 = scmp.eq.s32.totalorder %s33, 0
      %p247 = por %p245, %p246
      %p248 = scmp.ne.s32.totalorder %s234, %s235
      %p249 = scmp.eq.s32.totalorder %s34, 1
      %p250 = por %p248, %p249
      %p252 = scmp.ne.s32.totalorder %s235, %s251
      %p253 = scmp.eq.s32.totalorder %s34, 0
      %p254 = por %p252, %p253
      %p255 = scmp.le.s32.totalorder 1, %s28
      %p256 = scmp.lt.s32.totalorder %s28, 3
      %p257 = pnand %p255, %p256
      %p258 = pneg %p257
      // Predicated region
      $region9: #{tpu_custom_call.1} parent=5 // pred_check
        _
      $region10: #{tpu_custom_call.1} parent=5 // pred_check_branch
        %260 = sbr.rel (%p257) target = $region12
      $region11: #{tpu_custom_call.1} parent=5 // pred_region
        %s261 = ssub.s32 %s28, 1
        // Predicated region
        $region13: #{tpu_custom_call.1} parent=11 // pred_check
          %p262 = pneg %p49
        $region14: #{tpu_custom_call.1} parent=11 // pred_check_branch
          %264 = sbr.rel (%p262) target = $region16
        $region15: #{tpu_custom_call.1} parent=11 // pred_region
          %s266 = ssub.s32 16, 16
          %267 = vsyncadd [#allocation5], %s266
          %s269 = sshll.u32 %s0, 4
          %s270 = int_to_ptr.vmem [resolvable:$true] %s269
          %272 = dma.vmem_to_smem %s270, 16, [#allocation2], [#allocation5]
        $region16: #{tpu_custom_call.1} parent=11 // pred_fallthru
          _
        // Predicated region
        $region17: #{tpu_custom_call.1} parent=11 // pred_check
          %p273 = pneg %p96
        $region18: #{tpu_custom_call.1} parent=11 // pred_check_branch
          %275 = sbr.rel (%p273) target = $region20
        $region19: #{tpu_custom_call.1} parent=11 // pred_region
          _
        $region20: #{tpu_custom_call.1} parent=11 // pred_fallthru
          _
        // Predicated region
        $region21: #{tpu_custom_call.1} parent=11 // pred_check
          %p276 = pneg %p117
        $region22: #{tpu_custom_call.1} parent=11 // pred_check_branch
          %278 = sbr.rel (%p276) target = $region24
        $region23: #{tpu_custom_call.1} parent=11 // pred_region
          _
        $region24: #{tpu_custom_call.1} parent=11 // pred_fallthru
          _
      $region12: #{tpu_custom_call.1} parent=5 // pred_fallthru
        _
      %p279 = scmp.lt.s32.totalorder %s28, 2
      // Predicated region
      $region25: #{tpu_custom_call.1} parent=5 // pred_check
        %p280 = pneg %p279
      $region26: #{tpu_custom_call.1} parent=5 // pred_check_branch
        %282 = sbr.rel (%p280) target = $region28
      $region27: #{tpu_custom_call.1} parent=5 // pred_region
        // Predicated region
        $region29: #{tpu_custom_call.1} parent=27 // pred_check
          %p283 = pneg %p69
        $region30: #{tpu_custom_call.1} parent=27 // pred_check_branch
          %285 = sbr.rel (%p283) target = $region32
        $region31: #{tpu_custom_call.1} parent=27 // pred_region
          %s286 = sand.u32 %s59, 1
          %s287 = scalar_lea.sflag [#allocation3], %s286
          %s288 = sand.u32 %s59, 1
          %s289 = smul.addr %s288, 16
          %s290 = scalar_lea.vmem [#allocation6], %s289
          %s292 = ssub.s32 256, 256
          %293 = vsyncadd %s287, %s292
          %s294 = smul.addr %s28, 128
          %s295 = scalar_lea.hbm %s1, %s294
          %s296 = sshll.u32 %s290, 4
          %s297 = int_to_ptr.vmem [resolvable:$true] %s296
          %302 = dma.hbm_to_vmem [thread:$0]  %s295, 256, %s297, %s287, 256, 128, 8
        $region32: #{tpu_custom_call.1} parent=27 // pred_fallthru
          _
        // Predicated region
        $region33: #{tpu_custom_call.1} parent=27 // pred_check
          %p303 = pneg %p137
        $region34: #{tpu_custom_call.1} parent=27 // pred_check_branch
          %305 = sbr.rel (%p303) target = $region36
        $region35: #{tpu_custom_call.1} parent=27 // pred_region
          %s306 = sand.u32 %s28, 1
          %s307 = scalar_lea.sflag [#allocation8], %s306
          %s308 = sand.u32 %s127, 1
          %s309 = smul.addr %s308, 8
          %s310 = scalar_lea.vmem [#allocation7], %s309
          %s312 = ssub.s32 128, 128
          %313 = vsyncadd %s307, %s312
          %s314 = smul.addr %s28, 128
          %s315 = scalar_lea.hbm %s4, %s314
          %s317 = sshll.u32 %s310, 4
          %s318 = int_to_ptr.vmem [resolvable:$true] %s317
          %320 = dma.hbm_to_vmem [thread:$0]  %s315, 128, %s318, %s307
        $region36: #{tpu_custom_call.1} parent=27 // pred_fallthru
          _
        // Predicated region
        $region37: #{tpu_custom_call.1} parent=27 // pred_check
          %p321 = pneg %p163
        $region38: #{tpu_custom_call.1} parent=27 // pred_check_branch
          %323 = sbr.rel (%p321) target = $region40
        $region39: #{tpu_custom_call.1} parent=27 // pred_region
          %s324 = sand.u32 %s28, 1
          %s325 = scalar_lea.sflag [#allocation8], %s324
          %s326 = sand.u32 %s153, 1
          %s327 = smul.addr %s326, 8
          %s328 = scalar_lea.vmem [#allocation9], %s327
          %s330 = ssub.s32 128, 128
          %331 = vsyncadd %s325, %s330
          %s332 = smul.addr %s28, 128
          %s333 = scalar_lea.hbm %s5, %s332
          %s335 = sshll.u32 %s328, 4
          %s336 = int_to_ptr.vmem [resolvable:$true] %s335
          %338 = dma.hbm_to_vmem [thread:$0]  %s333, 128, %s336, %s325
        $region40: #{tpu_custom_call.1} parent=27 // pred_fallthru
          _
      $region28: #{tpu_custom_call.1} parent=5 // pred_fallthru
        _
      %p339 = scmp.le.s32.totalorder 1, %s28
      %p340 = scmp.lt.s32.totalorder %s28, 3
      %p341 = pnand %p339, %p340
      %p342 = pneg %p341
      // Predicated region
      $region41: #{tpu_custom_call.1} parent=5 // pred_check
        _
      $region42: #{tpu_custom_call.1} parent=5 // pred_check_branch
        %344 = sbr.rel (%p341) target = $region44
      $region43: #{tpu_custom_call.1} parent=5 // pred_region
        %s345 = ssub.s32 %s28, 1
        // Predicated region
        $region45: #{tpu_custom_call.1} parent=43 // pred_check
          %p346 = pneg %p49
        $region46: #{tpu_custom_call.1} parent=43 // pred_check_branch
          %348 = sbr.rel (%p346) target = $region48
        $region47: #{tpu_custom_call.1} parent=43 // pred_region
          %349 = dma.done [#allocation5], 16
        $region48: #{tpu_custom_call.1} parent=43 // pred_fallthru
          _
        %s350 = sand.u32 %s62, 1
        %s351 = scalar_lea.sflag [#allocation3], %s350
        %s352 = sand.u32 %s62, 1
        %s353 = smul.addr %s352, 16
        %s354 = scalar_lea.vmem [#allocation6], %s353
        // Predicated region
        $region49: #{tpu_custom_call.1} parent=43 // pred_check
          %p355 = pneg %p75
        $region50: #{tpu_custom_call.1} parent=43 // pred_check_branch
          %357 = sbr.rel (%p355) target = $region52
        $region51: #{tpu_custom_call.1} parent=43 // pred_region
          %358 = dma.done %s351, 256
        $region52: #{tpu_custom_call.1} parent=43 // pred_fallthru
          _
        %s359 = sand.u32 %s33, 1
        %s360 = scalar_lea.sflag [#allocation8], %s359
        %s361 = sand.u32 %s130, 1
        %s362 = smul.addr %s361, 8
        %s363 = scalar_lea.vmem [#allocation7], %s362
        // Predicated region
        $region53: #{tpu_custom_call.1} parent=43 // pred_check
          %p364 = pneg %p143
        $region54: #{tpu_custom_call.1} parent=43 // pred_check_branch
          %366 = sbr.rel (%p364) target = $region56
        $region55: #{tpu_custom_call.1} parent=43 // pred_region
          %367 = dma.done %s360, 128
        $region56: #{tpu_custom_call.1} parent=43 // pred_fallthru
          _
        %s368 = sand.u32 %s33, 1
        %s369 = scalar_lea.sflag [#allocation8], %s368
        %s370 = sand.u32 %s156, 1
        %s371 = smul.addr %s370, 8
        %s372 = scalar_lea.vmem [#allocation9], %s371
        // Predicated region
        $region57: #{tpu_custom_call.1} parent=43 // pred_check
          %p373 = pneg %p169
        $region58: #{tpu_custom_call.1} parent=43 // pred_check_branch
          %375 = sbr.rel (%p373) target = $region60
        $region59: #{tpu_custom_call.1} parent=43 // pred_region
          %376 = dma.done %s369, 128
        $region60: #{tpu_custom_call.1} parent=43 // pred_fallthru
          _
        %377 = sfence
        %p378 = pneg %p49
        %p379 = pneg %p46
        %s380 = sand.u32 %s62, 1
        %s381 = scalar_lea.sflag [#allocation3], %s380
        %s382 = sand.u32 %s62, 1
        %s383 = smul.addr %s382, 16
        %s384 = scalar_lea.vmem [#allocation6], %s383
        %p385 = pneg %p75
        %p386 = pneg %p72
        %p387 = pneg %p96
        %p388 = pneg %p93
        %p389 = pneg %p117
        %p390 = pneg %p114
        %s391 = sand.u32 %s33, 1
        %s392 = scalar_lea.sflag [#allocation8], %s391
        %s393 = sand.u32 %s130, 1
        %s394 = smul.addr %s393, 8
        %s395 = scalar_lea.vmem [#allocation7], %s394
        %p396 = pneg %p143
        %p397 = pneg %p140
        %s398 = sand.u32 %s33, 1
        %s399 = scalar_lea.sflag [#allocation8], %s398
        %s400 = sand.u32 %s156, 1
        %s401 = smul.addr %s400, 8
        %s402 = scalar_lea.vmem [#allocation9], %s401
        %p403 = pneg %p169
        %p404 = pneg %p166
        %p405 = pneg %p195
        %p406 = pneg %p192
        %s407 = sand.u32 %s182, 1
        %s408 = scalar_lea.sflag [#allocation4], %s407
        %s409 = sand.u32 %s182, 1
        %s410 = smul.addr %s409, 16
        %s411 = scalar_lea.vmem [#allocation10], %s410
        %p412 = pneg %p221
        %p413 = pneg %p218
        %s414 = sand.u32 %s33, 1
        %s415 = scalar_lea.sflag [#allocation12], %s414
        %s416 = sand.u32 %s208, 1
        %s417 = smul.addr %s416, 16
        %s418 = scalar_lea.vmem [#allocation11], %s417
        %p419 = pneg %p247
        %p420 = pneg %p244
        %s421 = sand.u32 %s33, 1
        %s422 = scalar_lea.sflag [#allocation12], %s421
        %s423 = sand.u32 %s234, 1
        %s424 = smul.addr %s423, 8
        %s425 = scalar_lea.vmem [#allocation13], %s424
        %s427 = sld [smem:[#allocation2]]
        %s428 = sld [smem:[#allocation2 + $0x1]]
        %s429 = smul.f32 %s427, 2.0
        %v430 = vld [vmem:[%s2] sm:$0xf]
        %v431 = vld [vmem:[%s2 + $0x4] sm:$0xf]
        %v432 = vld [vmem:[%s2 + $0x8] sm:$0xf]
        %v433 = vld [vmem:[%s2 + $0xc] sm:$0xf]
        %v434 = vld [vmem:[%s2 + $0x10] sm:$0xf]
        %v435 = vld [vmem:[%s2 + $0x14] sm:$0xf]
        %v436 = vld [vmem:[%s2 + $0x18] sm:$0xf]
        %v437 = vld [vmem:[%s2 + $0x1c] sm:$0xf]
        %v438 = vld [vmem:[%s2 + $0x20] sm:$0xf]
        %v439 = vld [vmem:[%s2 + $0x24] sm:$0xf]
        %v440 = vld [vmem:[%s2 + $0x28] sm:$0xf]
        %v441 = vld [vmem:[%s2 + $0x2c] sm:$0xf]
        %v442 = vld [vmem:[%s2 + $0x30] sm:$0xf]
        %v443 = vld [vmem:[%s2 + $0x34] sm:$0xf]
        %v444 = vld [vmem:[%s2 + $0x38] sm:$0xf]
        %v445 = vld [vmem:[%s2 + $0x3c] sm:$0xf]
        %v446 = vld [vmem:[%s3] sm:$0x1]
        %v447 = vld [vmem:[%s354] sm:$0xff]
        %v448 = vld [vmem:[%s354 + $0x8] sm:$0xff]
        %v449 = vpack.c.bf16 %v448, %v447
        %v451 = vlaneseq
        %v452 = vshrl.u32 %v451, 7
        %v453 = vsub.s32 0, %v452
        %v454 = vrot.slane %v446, %v453
        %v472 = vunpack.c.l.b16 %v430
        %v473 = vunpack.c.l.b16 %v431
        %v474 = vunpack.c.l.b16 %v432
        %v475 = vunpack.c.l.b16 %v433
        %v476 = vunpack.c.l.b16 %v434
        %v477 = vunpack.c.l.b16 %v435
        %v478 = vunpack.c.l.b16 %v436
        %v479 = vunpack.c.l.b16 %v437
        %v480 = vunpack.c.l.b16 %v438
        %v481 = vunpack.c.l.b16 %v439
        %v482 = vunpack.c.l.b16 %v440
        %v483 = vunpack.c.l.b16 %v441
        %v484 = vunpack.c.l.b16 %v442
        %v485 = vunpack.c.l.b16 %v443
        %v486 = vunpack.c.l.b16 %v444
        %v487 = vunpack.c.l.b16 %v445
        %v488 = vpack.c.b16 %v473, %v472
        %v489 = vpack.c.b16 %v475, %v474
        %v490 = vpack.c.b16 %v477, %v476
        %v491 = vpack.c.b16 %v479, %v478
        %v492 = vpack.c.b16 %v481, %v480
        %v493 = vpack.c.b16 %v483, %v482
        %v494 = vpack.c.b16 %v485, %v484
        %v495 = vpack.c.b16 %v487, %v486
        %504 = vmatprep.subr.bf16.mxu0 0
        %505 = vmatpush1.bf16.msra.mxu0 %v488
        %506 = vmatprep.subr.bf16.mxu0 0
        %507 = vmatpush1.bf16.msra.mxu0 %v489
        %508 = vmatprep.subr.bf16.mxu0 0
        %509 = vmatpush1.bf16.msra.mxu0 %v490
        %510 = vmatprep.subr.bf16.mxu0 0
        %511 = vmatpush1.bf16.msra.mxu0 %v491
        %512 = vmatprep.subr.bf16.mxu0 0
        %513 = vmatpush1.bf16.msra.mxu0 %v492
        %514 = vmatprep.subr.bf16.mxu0 0
        %515 = vmatpush1.bf16.msra.mxu0 %v493
        %516 = vmatprep.subr.bf16.mxu0 0
        %517 = vmatpush1.bf16.msra.mxu0 %v494
        %518 = vmatprep.subr.bf16.mxu0 0
        %519 = vmatpush1.bf16.msra.mxu0 %v495
        %520 = vmatprep.subr.bf16.mxu0 0
        %521 = vmatpush1.bf16.msra.mxu0 0
        %522 = vmatprep.subr.bf16.mxu0 0
        %523 = vmatpush1.bf16.msra.mxu0 0
        %524 = vmatprep.subr.bf16.mxu0 0
        %525 = vmatpush1.bf16.msra.mxu0 0
        %526 = vmatprep.subr.bf16.mxu0 0
        %527 = vmatpush1.bf16.msra.mxu0 0
        %528 = vmatprep.subr.bf16.mxu0 0
        %529 = vmatpush1.bf16.msra.mxu0 0
        %530 = vmatprep.subr.bf16.mxu0 0
        %531 = vmatpush1.bf16.msra.mxu0 0
        %532 = vmatprep.subr.bf16.mxu0 0
        %533 = vmatpush1.bf16.msra.mxu0 0
        %534 = vmatprep.subr.bf16.mxu0 0
        %535 = vmatpush1.bf16.msra.mxu0 0
        %536 = vmatprep.mubr.bf16.mxu0 0
        %537 = vmatmul.mubr.bf16.gmra.mrb[0].mxu0 %v449
        %v538 = vpop.f32.mrb[0].mxu0
        %v539 = vadd.f32 %v454, %v538
        %v540 = vpop.f32.mrb[0].mxu0
        %v541 = vpop.f32.mrb[0].mxu0
        %v542 = vadd.f32 %v454, %v541
        %v543 = vpop.f32.mrb[0].mxu0
        %544 = vdwg.mxu0
        %v545 = vld [vmem:[%s363] sm:$0xff]
        %v546 = vstv %s428
        %v547 = vmul.f32 %v545, %v546
        %v548 = vadd.f32 %v447, %v547
        %v549 = vstv %s427
        %v550 = vmul.f32 %v539, %v549
        %v551 = vadd.f32 %v548, %v550
        %v552 = vld [vmem:[%s372] sm:$0xff]
        %v553 = vmul.f32 %v552, %v546
        %v554 = vpack.c.bf16 %v551, %v551
        %555 = vmatprep.subr.bf16.mxu0 0
        %556 = vmatpush1.bf16.msra.mxu0 %v488
        %557 = vmatprep.subr.bf16.mxu0 0
        %558 = vmatpush1.bf16.msra.mxu0 %v489
        %559 = vmatprep.subr.bf16.mxu0 0
        %560 = vmatpush1.bf16.msra.mxu0 %v490
        %561 = vmatprep.subr.bf16.mxu0 0
        %562 = vmatpush1.bf16.msra.mxu0 %v491
        %563 = vmatprep.subr.bf16.mxu0 0
        %564 = vmatpush1.bf16.msra.mxu0 %v492
        %565 = vmatprep.subr.bf16.mxu0 0
        %566 = vmatpush1.bf16.msra.mxu0 %v493
        %567 = vmatprep.subr.bf16.mxu0 0
        %568 = vmatpush1.bf16.msra.mxu0 %v494
        %569 = vmatprep.subr.bf16.mxu0 0
        %570 = vmatpush1.bf16.msra.mxu0 %v495
        %571 = vmatprep.subr.bf16.mxu0 0
        %572 = vmatpush1.bf16.msra.mxu0 0
        %573 = vmatprep.subr.bf16.mxu0 0
        %574 = vmatpush1.bf16.msra.mxu0 0
        %575 = vmatprep.subr.bf16.mxu0 0
        %576 = vmatpush1.bf16.msra.mxu0 0
        %577 = vmatprep.subr.bf16.mxu0 0
        %578 = vmatpush1.bf16.msra.mxu0 0
        %579 = vmatprep.subr.bf16.mxu0 0
        %580 = vmatpush1.bf16.msra.mxu0 0
        %581 = vmatprep.subr.bf16.mxu0 0
        %582 = vmatpush1.bf16.msra.mxu0 0
        %583 = vmatprep.subr.bf16.mxu0 0
        %584 = vmatpush1.bf16.msra.mxu0 0
        %585 = vmatprep.subr.bf16.mxu0 0
        %586 = vmatpush1.bf16.msra.mxu0 0
        %587 = vmatprep.mubr.bf16.mxu0 0
        %588 = vmatmul.mubr.bf16.gmra.mrb[0].mxu0 %v554
        %v589 = vpop.f32.mrb[0].mxu0
        %v590 = vadd.f32 %v454, %v589
        %v591 = vpop.f32.mrb[0].mxu0
        %v592 = vpop.f32.mrb[0].mxu0
        %v593 = vpop.f32.mrb[0].mxu0
        %594 = vdwg.mxu0
        %v595 = vadd.f32 %v551, %v553
        %v596 = vmul.f32 %v590, %v549
        %v597 = vadd.f32 %v595, %v596
        %v598 = vadd.f32 %v547, %v553
        %v599 = vadd.f32 %v448, %v598
        %v600 = vstv %s429
        %v601 = vmul.f32 %v542, %v600
        %v602 = vadd.f32 %v599, %v601
        %603 = vst [vmem:[%s411] sm:$0xff] %v597
        %s604 = scalar_lea.vmem %s411, 8 [#allocation10]
        %605 = vst [vmem:[%s604] sm:$0xff] %v602
        %606 = vst [vmem:[%s418] sm:$0xff] %v539
        %607 = vst [vmem:[%s418 + $0x8] sm:$0xff] %v542
        %608 = vst [vmem:[%s425] sm:$0xff] %v598
        %s609 = sand.u32 %s182, 1
        %s610 = scalar_lea.sflag [#allocation4], %s609
        %s611 = sand.u32 %s182, 1
        %s612 = smul.addr %s611, 16
        %s613 = scalar_lea.vmem [#allocation10], %s612
        %s614 = sand.u32 %s33, 1
        %s615 = scalar_lea.sflag [#allocation12], %s614
        %s616 = sand.u32 %s208, 1
        %s617 = smul.addr %s616, 16
        %s618 = scalar_lea.vmem [#allocation11], %s617
        %s619 = sand.u32 %s33, 1
        %s620 = scalar_lea.sflag [#allocation12], %s619
        %s621 = sand.u32 %s234, 1
        %s622 = smul.addr %s621, 8
        %s623 = scalar_lea.vmem [#allocation13], %s622
        // Predicated region
        $region61: #{tpu_custom_call.1} parent=43 // pred_check
          %p624 = pneg %p192
        $region62: #{tpu_custom_call.1} parent=43 // pred_check_branch
          %626 = sbr.rel (%p624) target = $region64
        $region63: #{tpu_custom_call.1} parent=43 // pred_region
          %s628 = ssub.s32 256, 256
          %629 = vsyncadd %s610, %s628
          %s630 = smul.addr %s33, 128
          %s631 = scalar_lea.hbm %s6, %s630
          %s632 = sshll.u32 %s613, 4
          %s633 = int_to_ptr.vmem [resolvable:$true] %s632
          %638 = dma.vmem_to_hbm [thread:$0]  %s633, 256, %s631, %s610, 128, 256, 8
        $region64: #{tpu_custom_call.1} parent=43 // pred_fallthru
          _
        // Predicated region
        $region65: #{tpu_custom_call.1} parent=43 // pred_check
          %p639 = pneg %p218
        $region66: #{tpu_custom_call.1} parent=43 // pred_check_branch
          %641 = sbr.rel (%p639) target = $region68
        $region67: #{tpu_custom_call.1} parent=43 // pred_region
          %s643 = ssub.s32 256, 256
          %644 = vsyncadd %s615, %s643
          %s645 = smul.addr %s33, 128
          %s646 = scalar_lea.hbm %s7, %s645
          %s647 = sshll.u32 %s618, 4
          %s648 = int_to_ptr.vmem [resolvable:$true] %s647
          %653 = dma.vmem_to_hbm [thread:$0]  %s648, 256, %s646, %s615, 128, 256, 8
        $region68: #{tpu_custom_call.1} parent=43 // pred_fallthru
          _
        // Predicated region
        $region69: #{tpu_custom_call.1} parent=43 // pred_check
          %p654 = pneg %p244
        $region70: #{tpu_custom_call.1} parent=43 // pred_check_branch
          %656 = sbr.rel (%p654) target = $region72
        $region71: #{tpu_custom_call.1} parent=43 // pred_region
          %s658 = ssub.s32 128, 128
          %659 = vsyncadd %s620, %s658
          %s660 = smul.addr %s33, 128
          %s661 = scalar_lea.hbm %s8, %s660
          %s663 = sshll.u32 %s623, 4
          %s664 = int_to_ptr.vmem [resolvable:$true] %s663
          %666 = dma.vmem_to_hbm [thread:$0]  %s664, 128, %s661, %s620
        $region72: #{tpu_custom_call.1} parent=43 // pred_fallthru
          _
      $region44: #{tpu_custom_call.1} parent=5 // pred_fallthru
        _
      %p667 = scmp.le.s32.totalorder 2, %s28
      // Predicated region
      $region73: #{tpu_custom_call.1} parent=5 // pred_check
        %p668 = pneg %p667
      $region74: #{tpu_custom_call.1} parent=5 // pred_check_branch
        %670 = sbr.rel (%p668) target = $region76
      $region75: #{tpu_custom_call.1} parent=5 // pred_region
        %s671 = ssub.s32 %s28, 2
        // Predicated region
        $region77: #{tpu_custom_call.1} parent=75 // pred_check
          %p672 = pneg %p198
        $region78: #{tpu_custom_call.1} parent=75 // pred_check_branch
          %674 = sbr.rel (%p672) target = $region80
        $region79: #{tpu_custom_call.1} parent=75 // pred_region
          %s675 = sand.u32 %s183, 1
          %s676 = scalar_lea.sflag [#allocation4], %s675
          %s677 = sand.u32 %s183, 1
          %s678 = smul.addr %s677, 16
          %s679 = scalar_lea.vmem [#allocation10], %s678
          %680 = dma.done %s676, 256
        $region80: #{tpu_custom_call.1} parent=75 // pred_fallthru
          _
        // Predicated region
        $region81: #{tpu_custom_call.1} parent=75 // pred_check
          %p681 = pneg %p224
        $region82: #{tpu_custom_call.1} parent=75 // pred_check_branch
          %683 = sbr.rel (%p681) target = $region84
        $region83: #{tpu_custom_call.1} parent=75 // pred_region
          %s684 = sand.u32 %s34, 1
          %s685 = scalar_lea.sflag [#allocation12], %s684
          %s686 = sand.u32 %s209, 1
          %s687 = smul.addr %s686, 16
          %s688 = scalar_lea.vmem [#allocation11], %s687
          %689 = dma.done %s685, 256
        $region84: #{tpu_custom_call.1} parent=75 // pred_fallthru
          _
        // Predicated region
        $region85: #{tpu_custom_call.1} parent=75 // pred_check
          %p690 = pneg %p250
        $region86: #{tpu_custom_call.1} parent=75 // pred_check_branch
          %692 = sbr.rel (%p690) target = $region88
        $region87: #{tpu_custom_call.1} parent=75 // pred_region
          %s693 = sand.u32 %s34, 1
          %s694 = scalar_lea.sflag [#allocation12], %s693
          %s695 = sand.u32 %s235, 1
          %s696 = smul.addr %s695, 8
          %s697 = scalar_lea.vmem [#allocation13], %s696
          %698 = dma.done %s694, 128
        $region88: #{tpu_custom_call.1} parent=75 // pred_fallthru
          _
      $region76: #{tpu_custom_call.1} parent=5 // pred_fallthru
        _
    $region6: #{tpu_custom_call.1} parent=1 // loop_footer
      %s32 = sadd.s32 1, %s28
    $region7: #{tpu_custom_call.1} parent=1 // loop_footer_branch
      %27 = sbr.rel target = $region3
    $region8: #{tpu_custom_call.1} parent=1 // loop_exit
      _
    %699 = vsyncpa [#allocation3], 1
    %s700 = scalar_lea.sflag [#allocation3], 1
    %701 = vsyncpa %s700, 1
    %702 = vsyncpa [#allocation8], 1
    %s703 = scalar_lea.sflag [#allocation8], 1
    %704 = vsyncpa %s703, 1
    %705 = vsyncpa [#allocation4], 1
    %s706 = scalar_lea.sflag [#allocation4], 1
    %707 = vsyncpa %s706, 1
    %708 = vsyncpa [#allocation12], 1
    %s709 = scalar_lea.sflag [#allocation12], 1
    %710 = vsyncpa %s709, 1
    %711 = vsyncpa [#allocation5], 1
    %s712 = scalar_lea.sflag [#allocation5], 1
    %713 = vsyncpa %s712, 1

</llo_original>
